<compile_context>
chip_gen: v7x
topology: tpu7x:2x2x1
jax: 0.10.0
libtpu: 0.0.40
codegen_flags: <defaults>
</compile_context>

<pallas_src>
import jax
import jax.numpy as jnp
from jax.experimental import pallas as pl
from jax.experimental.pallas import tpu as pltpu


def _is_scalar(x):
    return isinstance(x, (int, float)) or jnp.ndim(x) == 0


def _make_kernel(r_is_arr, vth_is_arr, vrst_is_arr, r_c, vth_c, vrst_c):
    """Build the kernel for the chosen scalar/tensor parameter combination."""

    def kernel(*refs):
        idx = 0
        i_ref = refs[idx]; idx += 1                       # (1, bm, N) current at step t
        if r_is_arr:
            r_val = refs[idx][...]; idx += 1              # per-neuron membrane resistance
        else:
            r_val = r_c
        if vth_is_arr:
            vth = refs[idx][...]; idx += 1
        else:
            vth = vth_c
        if vrst_is_arr:
            vrst = refs[idx][...]; idx += 1
        else:
            vrst = vrst_c
        v_in_ref = refs[idx]; idx += 1                    # initial self.v (read once per block)
        spike_ref, v_out_ref = refs[idx], refs[idx + 1]

        t = pl.program_id(1)

        @pl.when(t == 0)
        def _():
            # Load the initial membrane potential once per row block; v_out_ref
            # then stays resident in VMEM across all T steps (its block index
            # is constant along the time axis).
            v_out_ref[...] = v_in_ref[...]

        v_new = v_out_ref[...] + i_ref[0] * r_val         # v += i * r
        spike_ref[0] = (v_new >= vth).astype(spike_ref.dtype)
        v_out_ref[...] = jnp.clip(v_new, vrst, vth)       # truncate to [v_reset, v_threshold]

    return kernel


def base_node_forward(i_seq, v0, r, v_threshold, v_reset, *,
                      block_rows=128, spike_dtype=jnp.int8):
    """Run T fused timesteps of the BaseNode update.

    i_seq:       (T, M, N) float input currents (one per timestep).
    v0:          (M, N) float32 initial membrane potential (self.v).
    r:           float or (M, N) array (per-neuron membrane resistance).
    v_threshold: float or (M, N) array.
    v_reset:     float or (M, N) array (lower clip / reset voltage).

    Returns (spikes, v_final): spikes is (T, M, N) `spike_dtype` (0/1),
    v_final is (M, N) float32 (the updated self.v).
    """
    i_seq = jnp.asarray(i_seq, jnp.float32)
    v0 = jnp.asarray(v0, jnp.float32)
    T, M, N = i_seq.shape
    assert v0.shape == (M, N)
    assert N % 128 == 0, "flatten the neuron population so the last dim is a multiple of 128"

    bm = min(block_rows, M)
    assert M % bm == 0, "row count must be divisible by block_rows"
    assert bm % 8 == 0 or bm == M, "row block must be sublane-aligned"
    n_row_blocks = M // bm

    # Block specs.  i / spike blocks change with t (streamed); the "state"
    # blocks (r, v_threshold, v_reset, v) have a block index constant along t,
    # so they are DMA'd / written back only once per row block.
    i_spec = pl.BlockSpec((1, bm, N), lambda m, t: (t, m, 0))
    state_spec = pl.BlockSpec((bm, N), lambda m, t: (m, 0))
    spike_spec = pl.BlockSpec((1, bm, N), lambda m, t: (t, m, 0))

    operands = [i_seq]
    in_specs = [i_spec]

    def add_param(p):
        if _is_scalar(p):
            return False, float(p)
        arr = jnp.asarray(p, jnp.float32)
        assert arr.shape == (M, N), "tensor-valued neuron parameters must have the neuron shape"
        operands.append(arr)
        in_specs.append(state_spec)
        return True, None

    r_is_arr, r_c = add_param(r)
    vth_is_arr, vth_c = add_param(v_threshold)
    vrst_is_arr, vrst_c = add_param(v_reset)

    operands.append(v0)
    in_specs.append(state_spec)
    v_in_index = len(operands) - 1

    kernel = _make_kernel(r_is_arr, vth_is_arr, vrst_is_arr, r_c, vth_c, vrst_c)

    spike_bytes = T * M * N * jnp.dtype(spike_dtype).itemsize
    param_bytes = sum(int(op.size) * 4 for op in operands[1:-1])
    bytes_accessed = int(i_seq.size) * 4 + spike_bytes + 2 * M * N * 4 + param_bytes

    spikes, v_final = pl.pallas_call(
        kernel,
        out_shape=(
            jax.ShapeDtypeStruct((T, M, N), spike_dtype),   # out_spike per step
            jax.ShapeDtypeStruct((M, N), jnp.float32),      # updated self.v
        ),
        grid=(n_row_blocks, T),
        in_specs=in_specs,
        out_specs=(spike_spec, state_spec),
        input_output_aliases={v_in_index: 1},               # update v in place
        compiler_params=pltpu.CompilerParams(
            dimension_semantics=("parallel", "arbitrary")),
        cost_estimate=pl.CostEstimate(
            flops=5 * T * M * N, transcendentals=0,
            bytes_accessed=bytes_accessed),
    )(*operands)
    return spikes, v_final


def base_node_single_step(i, v, r, v_threshold, v_reset, **kwargs):
    """Single-step forward (matches BaseNode.forward(i) call shape)."""
    spikes, v_next = base_node_forward(i[None], v, r, v_threshold, v_reset, **kwargs)
    return spikes[0], v_next


def base_node_reference(i_seq, v0, r, v_threshold, v_reset):
    """Pure-JAX reference for the same T-step update."""
    r = jnp.asarray(r, jnp.float32)
    v_threshold = jnp.asarray(v_threshold, jnp.float32)
    v_reset = jnp.asarray(v_reset, jnp.float32)

    def step(v, i):
        v_new = v + i * r
        spike = (v_new >= v_threshold).astype(jnp.float32)
        v_new = jnp.clip(v_new, v_reset, v_threshold)
        return v_new, spike

    v_final, spikes = jax.lax.scan(step, v0, i_seq)
    return spikes, v_final


if __name__ == "__main__":
    key = jax.random.PRNGKey(0)
    k_i, k_r, k_th = jax.random.split(key, 3)

    # Neuron population flattened TPU-friendly: (M, N) = (256, 512), T = 8 steps.
    M, N, T = 256, 512, 8
    v_threshold = 1.0
    v_reset = 0.0

    r = 0.5 + jax.random.uniform(k_r, (M, N), dtype=jnp.float32)        # r in [0.5, 1.5)
    i_seq = jax.random.normal(k_i, (T, M, N), dtype=jnp.float32) * 2.0  # input currents

    # --- scalar-threshold path (array r) ------------------------------------
    v0 = jnp.full((M, N), v_reset, dtype=jnp.float32)                   # self.v at __init__
    ref_spikes, ref_v = base_node_reference(i_seq, v0, r, v_threshold, v_reset)

    spikes, v_final = base_node_forward(i_seq, jnp.full((M, N), v_reset, jnp.float32),
                                        r, v_threshold, v_reset, block_rows=128)
    jax.block_until_ready((spikes, v_final))

    assert spikes.dtype == jnp.int8
    spike_mismatch = jnp.mean((spikes.astype(jnp.float32) != ref_spikes).astype(jnp.float32))
    assert spike_mismatch < 1e-3, f"spike mismatch rate {spike_mismatch}"
    assert jnp.allclose(v_final, ref_v, atol=1e-4), "membrane potential mismatch"

    # --- tensor-valued v_threshold / v_reset path ----------------------------
    vth_arr = 1.0 + 0.1 * jax.random.uniform(k_th, (M, N), dtype=jnp.float32)
    vrst_arr = jnp.zeros((M, N), dtype=jnp.float32)
    ref_s2, ref_v2 = base_node_reference(i_seq, jnp.full((M, N), v_reset, jnp.float32),
                                         r, vth_arr, vrst_arr)
    s2, v2 = base_node_forward(i_seq, jnp.full((M, N), v_reset, jnp.float32),
                               r, vth_arr, vrst_arr, block_rows=128)
    jax.block_until_ready((s2, v2))
    s2_mismatch = jnp.mean((s2.astype(jnp.float32) != ref_s2).astype(jnp.float32))
    assert s2_mismatch < 1e-3, f"tensor-threshold spike mismatch rate {s2_mismatch}"
    assert jnp.allclose(v2, ref_v2, atol=1e-4), "tensor-threshold v mismatch"

    # --- single-step (forward(i)) path ---------------------------------------
    v0_s = jnp.full((M, N), v_reset, dtype=jnp.float32)
    spike1, v1 = base_node_single_step(i_seq[0], v0_s, r, v_threshold, v_reset)
    jax.block_until_ready((spike1, v1))
    assert jnp.allclose(v1, jnp.clip(jnp.zeros((M, N)) + i_seq[0] * r, v_reset, v_threshold),
                        atol=1e-4), "single-step v mismatch"

    print("KERNEL_OK")
</pallas_src>

<mosaic_0001>
module attributes {stable_mosaic.version = 11 : i64} {
  func.func @kernel(%arg0: i32, %arg1: i32, %arg2: memref<1x128x512xf32, #tpu.memory_space<vmem>>, %arg3: memref<128x512xf32, #tpu.memory_space<vmem>>, %arg4: memref<128x512xf32, #tpu.memory_space<vmem>>, %arg5: memref<1x128x512xi8, #tpu.memory_space<vmem>>, %arg6: memref<128x512xf32, #tpu.memory_space<vmem>>) attributes {dimension_semantics = [#tpu.dimension_semantics<parallel>, #tpu.dimension_semantics<arbitrary>], iteration_bounds = array<i64: 2, 8>, scalar_prefetch = 0 : i64, scratch_operands = 0 : i64, tpu.core_type = #tpu.core_type<tc>, window_params = [{transform_indices = @transform_0, window_bounds = array<i64: 1, 128, 512>}, {transform_indices = @transform_1, window_bounds = array<i64: 128, 512>}, {transform_indices = @transform_2, window_bounds = array<i64: 128, 512>}, {transform_indices = @transform_3, window_bounds = array<i64: 1, 128, 512>}, {transform_indices = @transform_4, window_bounds = array<i64: 128, 512>}]} {
    %c0 = arith.constant 0 : index
    %c0_0 = arith.constant 0 : index
    %0 = vector.load %arg3[%c0, %c0_0] : memref<128x512xf32, #tpu.memory_space<vmem>>, vector<128x512xf32>
    %c0_i32 = arith.constant 0 : i32
    %1 = arith.cmpi eq, %arg1, %c0_i32 : i32
    %2 = arith.extui %1 : i1 to i32
    %c0_i32_1 = arith.constant 0 : i32
    %3 = arith.cmpi ne, %2, %c0_i32_1 : i32
    scf.if %3 {
      %c0_14 = arith.constant 0 : index
      %c0_15 = arith.constant 0 : index
      %20 = vector.load %arg4[%c0_14, %c0_15] : memref<128x512xf32, #tpu.memory_space<vmem>>, vector<128x512xf32>
      %c0_16 = arith.constant 0 : index
      %c0_17 = arith.constant 0 : index
      %21 = vector.load %arg6[%c0_16, %c0_17] : memref<128x512xf32, #tpu.memory_space<vmem>>, vector<128x512xf32>
      tpu.vector_store %arg6[%c0_16, %c0_17], %20 {strides = array<i32>} : memref<128x512xf32, #tpu.memory_space<vmem>>, vector<128x512xf32>,
    } else {
    }
    %c0_2 = arith.constant 0 : index
    %c0_3 = arith.constant 0 : index
    %4 = vector.load %arg6[%c0_2, %c0_3] : memref<128x512xf32, #tpu.memory_space<vmem>>, vector<128x512xf32>
    %c0_4 = arith.constant 0 : index
    %c0_5 = arith.constant 0 : index
    %c0_6 = arith.constant 0 : index
    %5 = vector.load %arg2[%c0_4, %c0_5, %c0_6] : memref<1x128x512xf32, #tpu.memory_space<vmem>>, vector<1x128x512xf32>
    %6 = vector.shape_cast %5 : vector<1x128x512xf32> to vector<128x512xf32>
    %7 = arith.mulf %6, %0 : vector<128x512xf32>
    %8 = arith.addf %4, %7 : vector<128x512xf32>
    %cst = arith.constant 1.000000e+00 : f32
    %9 = vector.broadcast %cst : f32 to vector<128x512xf32>
    %10 = arith.cmpf oge, %8, %9 : vector<128x512xf32>
    %11 = arith.extui %10 : vector<128x512xi1> to vector<128x512xi8>
    %c0_7 = arith.constant 0 : index
    %c0_8 = arith.constant 0 : index
    %c0_9 = arith.constant 0 : index
    %12 = vector.load %arg5[%c0_7, %c0_8, %c0_9] : memref<1x128x512xi8, #tpu.memory_space<vmem>>, vector<1x128x512xi8>
    %13 = vector.shape_cast %12 : vector<1x128x512xi8> to vector<128x512xi8>
    %14 = vector.shape_cast %11 : vector<128x512xi8> to vector<1x128x512xi8>
    tpu.vector_store %arg5[%c0_7, %c0_8, %c0_9], %14 {strides = array<i32>} : memref<1x128x512xi8, #tpu.memory_space<vmem>>, vector<1x128x512xi8>,
    %cst_10 = arith.constant 0.000000e+00 : f32
    %cst_11 = arith.constant 1.000000e+00 : f32
    %15 = vector.broadcast %cst_10 : f32 to vector<128x512xf32>
    %16 = arith.maximumf %15, %8 : vector<128x512xf32>
    %17 = vector.broadcast %cst_11 : f32 to vector<128x512xf32>
    %18 = arith.minimumf %17, %16 : vector<128x512xf32>
    %c0_12 = arith.constant 0 : index
    %c0_13 = arith.constant 0 : index
    %19 = vector.load %arg6[%c0_12, %c0_13] : memref<128x512xf32, #tpu.memory_space<vmem>>, vector<128x512xf32>
    tpu.vector_store %arg6[%c0_12, %c0_13], %18 {strides = array<i32>} : memref<128x512xf32, #tpu.memory_space<vmem>>, vector<128x512xf32>,
    return
  }
  func.func @transform_0(%arg0: i32, %arg1: i32) -> (i32, i32, i32) {
    %c0_i32 = arith.constant 0 : i32
    %c0_i32_0 = arith.constant 0 : i32
    return %arg1, %arg0, %c0_i32 : i32, i32, i32
  }
  func.func @transform_1(%arg0: i32, %arg1: i32) -> (i32, i32) {
    %c0_i32 = arith.constant 0 : i32
    %c0_i32_0 = arith.constant 0 : i32
    return %arg0, %c0_i32 : i32, i32
  }
  func.func @transform_2(%arg0: i32, %arg1: i32) -> (i32, i32) {
    %c0_i32 = arith.constant 0 : i32
    %c0_i32_0 = arith.constant 0 : i32
    return %arg0, %c0_i32 : i32, i32
  }
  func.func @transform_3(%arg0: i32, %arg1: i32) -> (i32, i32, i32) {
    %c0_i32 = arith.constant 0 : i32
    %c0_i32_0 = arith.constant 0 : i32
    return %arg1, %arg0, %c0_i32 : i32, i32, i32
  }
  func.func @transform_4(%arg0: i32, %arg1: i32) -> (i32, i32) {
    %c0_i32 = arith.constant 0 : i32
    %c0_i32_0 = arith.constant 0 : i32
    return %arg0, %c0_i32 : i32, i32
  }
}

</mosaic_0001>

<llo_original>
// kernel: tpu_custom_call.1
$region0: #{tpu_custom_call.1}
  #allocation0 [shape = 'u32[]', space=smem, size = 0x4, offset = 0x4, fixed_abs, tag = 'smem constant byte address 0x4 - core index']
  #allocation1 [shape = 'u32[144,128]{1,0:T(1,128)}', space=vmem, size = 0x12000, scoped, tag = 'internal scratch']
  %s0 = inlined_call_operand.hbm [shape: f32[8,256,512], index: 0, kind: input, shape index: {}]
  %s1 = inlined_call_operand.hbm [shape: f32[256,512], index: 1, kind: input, shape index: {}]
  %s2 = inlined_call_operand.hbm [shape: f32[256,512], index: 2, kind: input, shape index: {}, may-alias: {2,4}]
  %s3 = inlined_call_operand.hbm [shape: s8[8,256,512], index: 3, kind: output, shape index: {0}]
  %s4 = inlined_call_operand.hbm [shape: f32[256,512], index: 4, kind: output, shape index: {1}, may-alias: {2,4}]
  %5 = xla_tuple %s3, %s4
  %s6 = sld [smem:[#allocation0]]
  $region69: #{tpu_custom_call.1} parent=0
    _
  %s8 = ssub.s32 1, %s6
  %s9 = scalar_select 0, %s8, %s6
  $region1: #{tpu_custom_call.1} parent=0
    #allocation2 [shape = 'u8[524288]{0}', space=vmem, size = 0x80000, scoped, tag = 'input window, operand 0']
    #allocation3 [shape = 's32[2]{0}', space=sflag, size = 0x8, scoped, tag = 'scoped memory for tpu_custom_call.1']
    #allocation4 [shape = 's32[2]{0}', space=sflag, size = 0x8, scoped, tag = 'scoped memory for tpu_custom_call.1']
    #allocation5 [shape = 'u8[524288]{0}', space=vmem, size = 0x80000, scoped, tag = 'input window, operand 1']
    #allocation6 [shape = 's32[2]{0}', space=sflag, size = 0x8, scoped, tag = 'scoped memory for tpu_custom_call.1']
    #allocation7 [shape = 'u8[524288]{0}', space=vmem, size = 0x80000, scoped, tag = 'input window, operand 2']
    #allocation8 [shape = 'u8[131072]{0}', space=vmem, size = 0x20000, scoped, tag = 'output window, operand 0']
    #allocation9 [shape = 'u8[524288]{0}', space=vmem, size = 0x80000, scoped, tag = 'output window, operand 1']
    #allocation10 [shape = 's32[2]{0}', space=sflag, size = 0x8, scoped, tag = 'scoped memory for tpu_custom_call.1']
    %10 = vsyncpa [#allocation3], 0
    %s11 = scalar_lea.sflag [#allocation3], 1
    %12 = vsyncpa %s11, 0
    %13 = vsyncpa [#allocation6], 0
    %s14 = scalar_lea.sflag [#allocation6], 1
    %15 = vsyncpa %s14, 0
    %16 = vsyncpa [#allocation4], 0
    %s17 = scalar_lea.sflag [#allocation4], 1
    %18 = vsyncpa %s17, 0
    %19 = vsyncpa [#allocation10], 0
    %s20 = scalar_lea.sflag [#allocation10], 1
    %21 = vsyncpa %s20, 0
    loop: start=0, step=1, limit=18
    $region2: #{tpu_custom_call.1} parent=1 // loop_pre_header
      _
    $region3: #{tpu_custom_call.1} parent=1 // loop_header
      %s23 = sphi 0, %s27
      %p24 = scmp.ge.s32.totalorder %s23, 18
      %s30 = sphi 0, %s42
      %s31 = sphi 0, %s38
      %s32 = sphi 0, %s30
      %s33 = sphi 0, %s31
      %s34 = sphi 0, %s32
      %s35 = sphi 0, %s33
      %s47 = sphi 0, %s49
      %s50 = sphi 0, %s47
      %s51 = sphi 0, %s50
      %s67 = sphi 0, %s51
      %s73 = sphi 0, %s75
      %s76 = sphi 0, %s73
      %s77 = sphi 0, %s76
      %s93 = sphi 0, %s77
      %s99 = sphi 0, %s101
      %s102 = sphi 0, %s99
      %s103 = sphi 0, %s102
      %s119 = sphi 0, %s103
      %s127 = sphi 0, %s129
      %s130 = sphi 0, %s127
      %s131 = sphi 0, %s130
      %s147 = sphi 0, %s131
      %s153 = sphi 0, %s155
      %s156 = sphi 0, %s153
      %s157 = sphi 0, %s156
      %s173 = sphi 0, %s157
    $region4: #{tpu_custom_call.1} parent=1 // loop_header_branch
      %26 = sbr.rel (%p24) target = $region8
    $region5: #{tpu_custom_call.1} parent=1 // loop_body
      %s28 = ssub.s32 %s23, 1
      %s29 = ssub.s32 %s23, 2
      %s36 = sadd.s32 1, %s31
      %p37 = scmp.ge.s32.totalorder %s36, 8
      %s38 = scalar_select %p37, 0, %s36
      %s39 = sadd.s32 1, %s30
      %s40 = scalar_select %p37, %s39, %s30
      %p41 = scmp.ge.s32.totalorder %s40, 2
      %s42 = scalar_select %p41, 0, %s40
      %s43 = ssub.s32 %s31, %s38
      %s44 = ssub.s32 %s30, %s42
      %s45 = sor.u32 %s43, %s44
      %p46 = scmp.eq.s32.totalorder %s45, 0
      %s48 = sadd.s32 %s47, 1
      %s49 = scalar_select %p46, %s47, %s48
      %p52 = pneg %p46
      %p53 = scmp.eq.s32.totalorder %s23, 15
      %p54 = por %p52, %p53
      %p55 = scmp.ne.s32.totalorder %s47, %s50
      %p56 = scmp.eq.s32.totalorder %s23, 0
      %p57 = por %p55, %p56
      %p58 = scmp.ne.s32.totalorder %s47, %s50
      %p59 = scmp.eq.s32.totalorder %s28, 15
      %p60 = por %p58, %p59
      %p61 = scmp.ne.s32.totalorder %s50, %s51
      %p62 = scmp.eq.s32.totalorder %s28, 0
      %p63 = por %p61, %p62
      %p64 = scmp.ne.s32.totalorder %s50, %s51
      %p65 = scmp.eq.s32.totalorder %s29, 15
      %p66 = por %p64, %p65
      %p68 = scmp.ne.s32.totalorder %s51, %s67
      %p69 = scmp.eq.s32.totalorder %s29, 0
      %p70 = por %p68, %p69
      %s71 = ssub.s32 %s30, %s42
      %p72 = scmp.eq.s32.totalorder %s71, 0
      %s74 = sadd.s32 %s73, 1
      %s75 = scalar_select %p72, %s73, %s74
      %p78 = pneg %p72
      %p79 = scmp.eq.s32.totalorder %s23, 15
      %p80 = por %p78, %p79
      %p81 = scmp.ne.s32.totalorder %s73, %s76
      %p82 = scmp.eq.s32.totalorder %s23, 0
      %p83 = por %p81, %p82
      %p84 = scmp.ne.s32.totalorder %s73, %s76
      %p85 = scmp.eq.s32.totalorder %s28, 15
      %p86 = por %p84, %p85
      %p87 = scmp.ne.s32.totalorder %s76, %s77
      %p88 = scmp.eq.s32.totalorder %s28, 0
      %p89 = por %p87, %p88
      %p90 = scmp.ne.s32.totalorder %s76, %s77
      %p91 = scmp.eq.s32.totalorder %s29, 15
      %p92 = por %p90, %p91
      %p94 = scmp.ne.s32.totalorder %s77, %s93
      %p95 = scmp.eq.s32.totalorder %s29, 0
      %p96 = por %p94, %p95
      %s97 = ssub.s32 %s30, %s42
      %p98 = scmp.eq.s32.totalorder %s97, 0
      %s100 = sadd.s32 %s99, 1
      %s101 = scalar_select %p98, %s99, %s100
      %p104 = pneg %p98
      %p105 = scmp.eq.s32.totalorder %s23, 15
      %p106 = por %p104, %p105
      %p107 = scmp.ne.s32.totalorder %s99, %s102
      %p108 = scmp.eq.s32.totalorder %s23, 0
      %p109 = por %p107, %p108
      %p110 = scmp.ne.s32.totalorder %s99, %s102
      %p111 = scmp.eq.s32.totalorder %s28, 15
      %p112 = por %p110, %p111
      %p113 = scmp.ne.s32.totalorder %s102, %s103
      %p114 = scmp.eq.s32.totalorder %s28, 0
      %p115 = por %p113, %p114
      %p116 = scmp.ne.s32.totalorder %s102, %s103
      %p117 = scmp.eq.s32.totalorder %s29, 15
      %p118 = por %p116, %p117
      %p120 = scmp.ne.s32.totalorder %s103, %s119
      %p121 = scmp.eq.s32.totalorder %s29, 0
      %p122 = por %p120, %p121
      %s123 = ssub.s32 %s31, %s38
      %s124 = ssub.s32 %s30, %s42
      %s125 = sor.u32 %s123, %s124
      %p126 = scmp.eq.s32.totalorder %s125, 0
      %s128 = sadd.s32 %s127, 1
      %s129 = scalar_select %p126, %s127, %s128
      %p132 = pneg %p126
      %p133 = scmp.eq.s32.totalorder %s23, 15
      %p134 = por %p132, %p133
      %p135 = scmp.ne.s32.totalorder %s127, %s130
      %p136 = scmp.eq.s32.totalorder %s23, 0
      %p137 = por %p135, %p136
      %p138 = scmp.ne.s32.totalorder %s127, %s130
      %p139 = scmp.eq.s32.totalorder %s28, 15
      %p140 = por %p138, %p139
      %p141 = scmp.ne.s32.totalorder %s130, %s131
      %p142 = scmp.eq.s32.totalorder %s28, 0
      %p143 = por %p141, %p142
      %p144 = scmp.ne.s32.totalorder %s130, %s131
      %p145 = scmp.eq.s32.totalorder %s29, 15
      %p146 = por %p144, %p145
      %p148 = scmp.ne.s32.totalorder %s131, %s147
      %p149 = scmp.eq.s32.totalorder %s29, 0
      %p150 = por %p148, %p149
      %s151 = ssub.s32 %s30, %s42
      %p152 = scmp.eq.s32.totalorder %s151, 0
      %s154 = sadd.s32 %s153, 1
      %s155 = scalar_select %p152, %s153, %s154
      %p158 = pneg %p152
      %p159 = scmp.eq.s32.totalorder %s23, 15
      %p160 = por %p158, %p159
      %p161 = scmp.ne.s32.totalorder %s153, %s156
      %p162 = scmp.eq.s32.totalorder %s23, 0
      %p163 = por %p161, %p162
      %p164 = scmp.ne.s32.totalorder %s153, %s156
      %p165 = scmp.eq.s32.totalorder %s28, 15
      %p166 = por %p164, %p165
      %p167 = scmp.ne.s32.totalorder %s156, %s157
      %p168 = scmp.eq.s32.totalorder %s28, 0
      %p169 = por %p167, %p168
      %p170 = scmp.ne.s32.totalorder %s156, %s157
      %p171 = scmp.eq.s32.totalorder %s29, 15
      %p172 = por %p170, %p171
      %p174 = scmp.ne.s32.totalorder %s157, %s173
      %p175 = scmp.eq.s32.totalorder %s29, 0
      %p176 = por %p174, %p175
      %p177 = scmp.le.s32.totalorder 1, %s23
      %p178 = scmp.lt.s32.totalorder %s23, 17
      %p179 = pnand %p177, %p178
      %p180 = pneg %p179
      // Predicated region
      $region9: #{tpu_custom_call.1} parent=5 // pred_check
        _
      $region10: #{tpu_custom_call.1} parent=5 // pred_check_branch
        %182 = sbr.rel (%p179) target = $region12
      $region11: #{tpu_custom_call.1} parent=5 // pred_region
        %s183 = ssub.s32 %s23, 1
      $region12: #{tpu_custom_call.1} parent=5 // pred_fallthru
        _
      %p184 = scmp.lt.s32.totalorder %s23, 16
      // Predicated region
      $region13: #{tpu_custom_call.1} parent=5 // pred_check
        %p185 = pneg %p184
      $region14: #{tpu_custom_call.1} parent=5 // pred_check_branch
        %187 = sbr.rel (%p185) target = $region16
      $region15: #{tpu_custom_call.1} parent=5 // pred_region
        // Predicated region
        $region17: #{tpu_custom_call.1} parent=15 // pred_check
          %p188 = pneg %p57
        $region18: #{tpu_custom_call.1} parent=15 // pred_check_branch
          %190 = sbr.rel (%p188) target = $region20
        $region19: #{tpu_custom_call.1} parent=15 // pred_region
          %s191 = sand.u32 %s47, 1
          %s192 = scalar_lea.sflag [#allocation3], %s191
          %s193 = sand.u32 %s47, 1
          %s194 = smul.addr %s193, 512
          %s195 = scalar_lea.vmem [#allocation2], %s194
          %s196 = smul.u32 16, %s30
          %s198 = ssub.s32 8192, 8192
          %199 = vsyncadd %s192, %s198
          %s200 = smul.addr %s196, 4
          %s201 = smul.addr %s31, 128
          %s202 = sadd.s32 %s200, %s201
          %s203 = smul.addr %s202, 128
          %s204 = scalar_lea.hbm %s0, %s203
          %s205 = sshll.u32 %s195, 4
          %s206 = int_to_ptr.vmem [resolvable:$true] %s205
          %211 = dma.hbm_to_vmem [thread:$0]  %s204, 8192, %s206, %s192, 512, 512, 32
        $region20: #{tpu_custom_call.1} parent=15 // pred_fallthru
          _
        // Predicated region
        $region21: #{tpu_custom_call.1} parent=15 // pred_check
          %p212 = pneg %p83
        $region22: #{tpu_custom_call.1} parent=15 // pred_check_branch
          %214 = sbr.rel (%p212) target = $region24
        $region23: #{tpu_custom_call.1} parent=15 // pred_region
          %s215 = sand.u32 %s23, 1
          %s216 = scalar_lea.sflag [#allocation6], %s215
          %s217 = sand.u32 %s73, 1
          %s218 = smul.addr %s217, 512
          %s219 = scalar_lea.vmem [#allocation5], %s218
          %s220 = smul.u32 16, %s30
          %s222 = ssub.s32 8192, 8192
          %223 = vsyncadd %s216, %s222
          %s224 = smul.addr %s220, 4
          %s225 = smul.addr %s224, 128
          %s226 = scalar_lea.hbm %s1, %s225
          %s227 = sshll.u32 %s219, 4
          %s228 = int_to_ptr.vmem [resolvable:$true] %s227
          %233 = dma.hbm_to_vmem [thread:$0]  %s226, 8192, %s228, %s216, 512, 512, 32
        $region24: #{tpu_custom_call.1} parent=15 // pred_fallthru
          _
        // Predicated region
        $region25: #{tpu_custom_call.1} parent=15 // pred_check
          %p234 = pneg %p109
        $region26: #{tpu_custom_call.1} parent=15 // pred_check_branch
          %236 = sbr.rel (%p234) target = $region28
        $region27: #{tpu_custom_call.1} parent=15 // pred_region
          %s237 = sand.u32 %s23, 1
          %s238 = scalar_lea.sflag [#allocation6], %s237
          %s239 = sand.u32 %s99, 1
          %s240 = smul.addr %s239, 512
          %s241 = scalar_lea.vmem [#allocation7], %s240
          %s242 = smul.u32 16, %s30
          %s244 = ssub.s32 8192, 8192
          %245 = vsyncadd %s238, %s244
          %s246 = smul.addr %s242, 4
          %s247 = smul.addr %s246, 128
          %s248 = scalar_lea.hbm %s2, %s247
          %s249 = sshll.u32 %s241, 4
          %s250 = int_to_ptr.vmem [resolvable:$true] %s249
          %255 = dma.hbm_to_vmem [thread:$0]  %s248, 8192, %s250, %s238, 512, 512, 32
        $region28: #{tpu_custom_call.1} parent=15 // pred_fallthru
          _
      $region16: #{tpu_custom_call.1} parent=5 // pred_fallthru
        _
      %p256 = scmp.le.s32.totalorder 1, %s23
      %p257 = scmp.lt.s32.totalorder %s23, 17
      %p258 = pnand %p256, %p257
      %p259 = pneg %p258
      // Predicated region
      $region29: #{tpu_custom_call.1} parent=5 // pred_check
        _
      $region30: #{tpu_custom_call.1} parent=5 // pred_check_branch
        %261 = sbr.rel (%p258) target = $region32
      $region31: #{tpu_custom_call.1} parent=5 // pred_region
        %s262 = ssub.s32 %s23, 1
        %s263 = sand.u32 %s50, 1
        %s264 = scalar_lea.sflag [#allocation3], %s263
        %s265 = sand.u32 %s50, 1
        %s266 = smul.addr %s265, 512
        %s267 = scalar_lea.vmem [#allocation2], %s266
        // Predicated region
        $region33: #{tpu_custom_call.1} parent=31 // pred_check
          %p268 = pneg %p63
        $region34: #{tpu_custom_call.1} parent=31 // pred_check_branch
          %270 = sbr.rel (%p268) target = $region36
        $region35: #{tpu_custom_call.1} parent=31 // pred_region
          %271 = dma.done %s264, 8192
        $region36: #{tpu_custom_call.1} parent=31 // pred_fallthru
          _
        %s272 = sand.u32 %s28, 1
        %s273 = scalar_lea.sflag [#allocation6], %s272
        %s274 = sand.u32 %s76, 1
        %s275 = smul.addr %s274, 512
        %s276 = scalar_lea.vmem [#allocation5], %s275
        // Predicated region
        $region37: #{tpu_custom_call.1} parent=31 // pred_check
          %p277 = pneg %p89
        $region38: #{tpu_custom_call.1} parent=31 // pred_check_branch
          %279 = sbr.rel (%p277) target = $region40
        $region39: #{tpu_custom_call.1} parent=31 // pred_region
          %280 = dma.done %s273, 8192
        $region40: #{tpu_custom_call.1} parent=31 // pred_fallthru
          _
        %s281 = sand.u32 %s28, 1
        %s282 = scalar_lea.sflag [#allocation6], %s281
        %s283 = sand.u32 %s102, 1
        %s284 = smul.addr %s283, 512
        %s285 = scalar_lea.vmem [#allocation7], %s284
        // Predicated region
        $region41: #{tpu_custom_call.1} parent=31 // pred_check
          %p286 = pneg %p115
        $region42: #{tpu_custom_call.1} parent=31 // pred_check_branch
          %288 = sbr.rel (%p286) target = $region44
        $region43: #{tpu_custom_call.1} parent=31 // pred_region
          %289 = dma.done %s282, 8192
        $region44: #{tpu_custom_call.1} parent=31 // pred_fallthru
          _
        %s290 = sand.u32 %s50, 1
        %s291 = scalar_lea.sflag [#allocation3], %s290
        %s292 = sand.u32 %s50, 1
        %s293 = smul.addr %s292, 512
        %s294 = scalar_lea.vmem [#allocation2], %s293
        %p295 = pneg %p63
        %p296 = pneg %p60
        %s297 = sand.u32 %s28, 1
        %s298 = scalar_lea.sflag [#allocation6], %s297
        %s299 = sand.u32 %s76, 1
        %s300 = smul.addr %s299, 512
        %s301 = scalar_lea.vmem [#allocation5], %s300
        %p302 = pneg %p89
        %p303 = pneg %p86
        %s304 = sand.u32 %s28, 1
        %s305 = scalar_lea.sflag [#allocation6], %s304
        %s306 = sand.u32 %s102, 1
        %s307 = smul.addr %s306, 512
        %s308 = scalar_lea.vmem [#allocation7], %s307
        %p309 = pneg %p115
        %p310 = pneg %p112
        %p311 = pneg %p143
        %p312 = pneg %p140
        %s313 = sand.u32 %s130, 1
        %s314 = scalar_lea.sflag [#allocation4], %s313
        %s315 = sand.u32 %s130, 1
        %s316 = smul.addr %s315, 128
        %s317 = scalar_lea.vmem [#allocation8], %s316
        %p318 = pneg %p169
        %p319 = pneg %p166
        %s320 = sand.u32 %s156, 1
        %s321 = scalar_lea.sflag [#allocation10], %s320
        %s322 = sand.u32 %s156, 1
        %s323 = smul.addr %s322, 512
        %s324 = scalar_lea.vmem [#allocation9], %s323
        %s325 = smul.u32 16, %s32
        %s326 = smul.u32 16, %s32
        %s327 = smul.u32 16, %s32
        %s328 = smul.u32 4, %s32
        %s329 = smul.u32 16, %s32
        %v332 = vld [vmem:[%s276] sm:$0xff]
        %v333 = vld [vmem:[%s276 + $0x8] sm:$0xff]
        %v334 = vld [vmem:[%s276 + $0x10] sm:$0xff]
        %v335 = vld [vmem:[%s276 + $0x18] sm:$0xff]
        %v336 = vld [vmem:[%s276 + $0x20] sm:$0xff]
        %v337 = vld [vmem:[%s276 + $0x28] sm:$0xff]
        %v338 = vld [vmem:[%s276 + $0x30] sm:$0xff]
        %v339 = vld [vmem:[%s276 + $0x38] sm:$0xff]
        %v340 = vld [vmem:[%s276 + $0x40] sm:$0xff]
        %v341 = vld [vmem:[%s276 + $0x48] sm:$0xff]
        %v342 = vld [vmem:[%s276 + $0x50] sm:$0xff]
        %v343 = vld [vmem:[%s276 + $0x58] sm:$0xff]
        %v344 = vld [vmem:[%s276 + $0x60] sm:$0xff]
        %v345 = vld [vmem:[%s276 + $0x68] sm:$0xff]
        %v346 = vld [vmem:[%s276 + $0x70] sm:$0xff]
        %v347 = vld [vmem:[%s276 + $0x78] sm:$0xff]
        %v348 = vld [vmem:[%s276 + $0x80] sm:$0xff]
        %v349 = vld [vmem:[%s276 + $0x88] sm:$0xff]
        %v350 = vld [vmem:[%s276 + $0x90] sm:$0xff]
        %v351 = vld [vmem:[%s276 + $0x98] sm:$0xff]
        %v352 = vld [vmem:[%s276 + $0xa0] sm:$0xff]
        %v353 = vld [vmem:[%s276 + $0xa8] sm:$0xff]
        %v354 = vld [vmem:[%s276 + $0xb0] sm:$0xff]
        %v355 = vld [vmem:[%s276 + $0xb8] sm:$0xff]
        %v356 = vld [vmem:[%s276 + $0xc0] sm:$0xff]
        %v357 = vld [vmem:[%s276 + $0xc8] sm:$0xff]
        %v358 = vld [vmem:[%s276 + $0xd0] sm:$0xff]
        %v359 = vld [vmem:[%s276 + $0xd8] sm:$0xff]
        %v360 = vld [vmem:[%s276 + $0xe0] sm:$0xff]
        %v361 = vld [vmem:[%s276 + $0xe8] sm:$0xff]
        %v362 = vld [vmem:[%s276 + $0xf0] sm:$0xff]
        %v363 = vld [vmem:[%s276 + $0xf8] sm:$0xff]
        %v364 = vld [vmem:[%s276 + $0x100] sm:$0xff]
        %v365 = vld [vmem:[%s276 + $0x108] sm:$0xff]
        %v366 = vld [vmem:[%s276 + $0x110] sm:$0xff]
        %v367 = vld [vmem:[%s276 + $0x118] sm:$0xff]
        %v368 = vld [vmem:[%s276 + $0x120] sm:$0xff]
        %v369 = vld [vmem:[%s276 + $0x128] sm:$0xff]
        %v370 = vld [vmem:[%s276 + $0x130] sm:$0xff]
        %v371 = vld [vmem:[%s276 + $0x138] sm:$0xff]
        %v372 = vld [vmem:[%s276 + $0x140] sm:$0xff]
        %v373 = vld [vmem:[%s276 + $0x148] sm:$0xff]
        %v374 = vld [vmem:[%s276 + $0x150] sm:$0xff]
        %v375 = vld [vmem:[%s276 + $0x158] sm:$0xff]
        %v376 = vld [vmem:[%s276 + $0x160] sm:$0xff]
        %v377 = vld [vmem:[%s276 + $0x168] sm:$0xff]
        %v378 = vld [vmem:[%s276 + $0x170] sm:$0xff]
        %v379 = vld [vmem:[%s276 + $0x178] sm:$0xff]
        %v380 = vld [vmem:[%s276 + $0x180] sm:$0xff]
        %v381 = vld [vmem:[%s276 + $0x188] sm:$0xff]
        %v382 = vld [vmem:[%s276 + $0x190] sm:$0xff]
        %v383 = vld [vmem:[%s276 + $0x198] sm:$0xff]
        %v384 = vld [vmem:[%s276 + $0x1a0] sm:$0xff]
        %v385 = vld [vmem:[%s276 + $0x1a8] sm:$0xff]
        %v386 = vld [vmem:[%s276 + $0x1b0] sm:$0xff]
        %v387 = vld [vmem:[%s276 + $0x1b8] sm:$0xff]
        %v388 = vld [vmem:[%s276 + $0x1c0] sm:$0xff]
        %v389 = vld [vmem:[%s276 + $0x1c8] sm:$0xff]
        %v390 = vld [vmem:[%s276 + $0x1d0] sm:$0xff]
        %v391 = vld [vmem:[%s276 + $0x1d8] sm:$0xff]
        %v392 = vld [vmem:[%s276 + $0x1e0] sm:$0xff]
        %v393 = vld [vmem:[%s276 + $0x1e8] sm:$0xff]
        %v394 = vld [vmem:[%s276 + $0x1f0] sm:$0xff]
        %v395 = vld [vmem:[%s276 + $0x1f8] sm:$0xff]
        %p396 = scmp.eq.s32.totalorder %s33, 0
        // Predicated region
        $region45: #{tpu_custom_call.1} parent=31 // pred_check
          %p397 = pneg %p396
        $region46: #{tpu_custom_call.1} parent=31 // pred_check_branch
          %399 = sbr.rel (%p397) target = $region48
        $region47: #{tpu_custom_call.1} parent=31 // pred_region
          %v400 = vld [vmem:[%s285] sm:$0xff]
          %v401 = vld [vmem:[%s285 + $0x8] sm:$0xff]
          %v402 = vld [vmem:[%s285 + $0x10] sm:$0xff]
          %v403 = vld [vmem:[%s285 + $0x18] sm:$0xff]
          %v404 = vld [vmem:[%s285 + $0x20] sm:$0xff]
          %v405 = vld [vmem:[%s285 + $0x28] sm:$0xff]
          %v406 = vld [vmem:[%s285 + $0x30] sm:$0xff]
          %v407 = vld [vmem:[%s285 + $0x38] sm:$0xff]
          %v408 = vld [vmem:[%s285 + $0x40] sm:$0xff]
          %v409 = vld [vmem:[%s285 + $0x48] sm:$0xff]
          %v410 = vld [vmem:[%s285 + $0x50] sm:$0xff]
          %v411 = vld [vmem:[%s285 + $0x58] sm:$0xff]
          %v412 = vld [vmem:[%s285 + $0x60] sm:$0xff]
          %v413 = vld [vmem:[%s285 + $0x68] sm:$0xff]
          %v414 = vld [vmem:[%s285 + $0x70] sm:$0xff]
          %v415 = vld [vmem:[%s285 + $0x78] sm:$0xff]
          %v416 = vld [vmem:[%s285 + $0x80] sm:$0xff]
          %v417 = vld [vmem:[%s285 + $0x88] sm:$0xff]
          %v418 = vld [vmem:[%s285 + $0x90] sm:$0xff]
          %v419 = vld [vmem:[%s285 + $0x98] sm:$0xff]
          %v420 = vld [vmem:[%s285 + $0xa0] sm:$0xff]
          %v421 = vld [vmem:[%s285 + $0xa8] sm:$0xff]
          %v422 = vld [vmem:[%s285 + $0xb0] sm:$0xff]
          %v423 = vld [vmem:[%s285 + $0xb8] sm:$0xff]
          %v424 = vld [vmem:[%s285 + $0xc0] sm:$0xff]
          %v425 = vld [vmem:[%s285 + $0xc8] sm:$0xff]
          %v426 = vld [vmem:[%s285 + $0xd0] sm:$0xff]
          %v427 = vld [vmem:[%s285 + $0xd8] sm:$0xff]
          %v428 = vld [vmem:[%s285 + $0xe0] sm:$0xff]
          %v429 = vld [vmem:[%s285 + $0xe8] sm:$0xff]
          %v430 = vld [vmem:[%s285 + $0xf0] sm:$0xff]
          %v431 = vld [vmem:[%s285 + $0xf8] sm:$0xff]
          %v432 = vld [vmem:[%s285 + $0x100] sm:$0xff]
          %v433 = vld [vmem:[%s285 + $0x108] sm:$0xff]
          %v434 = vld [vmem:[%s285 + $0x110] sm:$0xff]
          %v435 = vld [vmem:[%s285 + $0x118] sm:$0xff]
          %v436 = vld [vmem:[%s285 + $0x120] sm:$0xff]
          %v437 = vld [vmem:[%s285 + $0x128] sm:$0xff]
          %v438 = vld [vmem:[%s285 + $0x130] sm:$0xff]
          %v439 = vld [vmem:[%s285 + $0x138] sm:$0xff]
          %v440 = vld [vmem:[%s285 + $0x140] sm:$0xff]
          %v441 = vld [vmem:[%s285 + $0x148] sm:$0xff]
          %v442 = vld [vmem:[%s285 + $0x150] sm:$0xff]
          %v443 = vld [vmem:[%s285 + $0x158] sm:$0xff]
          %v444 = vld [vmem:[%s285 + $0x160] sm:$0xff]
          %v445 = vld [vmem:[%s285 + $0x168] sm:$0xff]
          %v446 = vld [vmem:[%s285 + $0x170] sm:$0xff]
          %v447 = vld [vmem:[%s285 + $0x178] sm:$0xff]
          %v448 = vld [vmem:[%s285 + $0x180] sm:$0xff]
          %v449 = vld [vmem:[%s285 + $0x188] sm:$0xff]
          %v450 = vld [vmem:[%s285 + $0x190] sm:$0xff]
          %v451 = vld [vmem:[%s285 + $0x198] sm:$0xff]
          %v452 = vld [vmem:[%s285 + $0x1a0] sm:$0xff]
          %v453 = vld [vmem:[%s285 + $0x1a8] sm:$0xff]
          %v454 = vld [vmem:[%s285 + $0x1b0] sm:$0xff]
          %v455 = vld [vmem:[%s285 + $0x1b8] sm:$0xff]
          %v456 = vld [vmem:[%s285 + $0x1c0] sm:$0xff]
          %v457 = vld [vmem:[%s285 + $0x1c8] sm:$0xff]
          %v458 = vld [vmem:[%s285 + $0x1d0] sm:$0xff]
          %v459 = vld [vmem:[%s285 + $0x1d8] sm:$0xff]
          %v460 = vld [vmem:[%s285 + $0x1e0] sm:$0xff]
          %v461 = vld [vmem:[%s285 + $0x1e8] sm:$0xff]
          %v462 = vld [vmem:[%s285 + $0x1f0] sm:$0xff]
          %v463 = vld [vmem:[%s285 + $0x1f8] sm:$0xff]
          %464 = vst [vmem:[%s324] sm:$0xff] %v400
          %465 = vst [vmem:[%s324 + $0x8] sm:$0xff] %v401
          %466 = vst [vmem:[%s324 + $0x10] sm:$0xff] %v402
          %467 = vst [vmem:[%s324 + $0x18] sm:$0xff] %v403
          %468 = vst [vmem:[%s324 + $0x20] sm:$0xff] %v404
          %469 = vst [vmem:[%s324 + $0x28] sm:$0xff] %v405
          %470 = vst [vmem:[%s324 + $0x30] sm:$0xff] %v406
          %471 = vst [vmem:[%s324 + $0x38] sm:$0xff] %v407
          %472 = vst [vmem:[%s324 + $0x40] sm:$0xff] %v408
          %473 = vst [vmem:[%s324 + $0x48] sm:$0xff] %v409
          %474 = vst [vmem:[%s324 + $0x50] sm:$0xff] %v410
          %475 = vst [vmem:[%s324 + $0x58] sm:$0xff] %v411
          %476 = vst [vmem:[%s324 + $0x60] sm:$0xff] %v412
          %477 = vst [vmem:[%s324 + $0x68] sm:$0xff] %v413
          %478 = vst [vmem:[%s324 + $0x70] sm:$0xff] %v414
          %479 = vst [vmem:[%s324 + $0x78] sm:$0xff] %v415
          %480 = vst [vmem:[%s324 + $0x80] sm:$0xff] %v416
          %481 = vst [vmem:[%s324 + $0x88] sm:$0xff] %v417
          %482 = vst [vmem:[%s324 + $0x90] sm:$0xff] %v418
          %483 = vst [vmem:[%s324 + $0x98] sm:$0xff] %v419
          %484 = vst [vmem:[%s324 + $0xa0] sm:$0xff] %v420
          %485 = vst [vmem:[%s324 + $0xa8] sm:$0xff] %v421
          %486 = vst [vmem:[%s324 + $0xb0] sm:$0xff] %v422
          %487 = vst [vmem:[%s324 + $0xb8] sm:$0xff] %v423
          %488 = vst [vmem:[%s324 + $0xc0] sm:$0xff] %v424
          %489 = vst [vmem:[%s324 + $0xc8] sm:$0xff] %v425
          %490 = vst [vmem:[%s324 + $0xd0] sm:$0xff] %v426
          %491 = vst [vmem:[%s324 + $0xd8] sm:$0xff] %v427
          %492 = vst [vmem:[%s324 + $0xe0] sm:$0xff] %v428
          %493 = vst [vmem:[%s324 + $0xe8] sm:$0xff] %v429
          %494 = vst [vmem:[%s324 + $0xf0] sm:$0xff] %v430
          %495 = vst [vmem:[%s324 + $0xf8] sm:$0xff] %v431
          %496 = vst [vmem:[%s324 + $0x100] sm:$0xff] %v432
          %497 = vst [vmem:[%s324 + $0x108] sm:$0xff] %v433
          %498 = vst [vmem:[%s324 + $0x110] sm:$0xff] %v434
          %499 = vst [vmem:[%s324 + $0x118] sm:$0xff] %v435
          %500 = vst [vmem:[%s324 + $0x120] sm:$0xff] %v436
          %501 = vst [vmem:[%s324 + $0x128] sm:$0xff] %v437
          %502 = vst [vmem:[%s324 + $0x130] sm:$0xff] %v438
          %503 = vst [vmem:[%s324 + $0x138] sm:$0xff] %v439
          %504 = vst [vmem:[%s324 + $0x140] sm:$0xff] %v440
          %505 = vst [vmem:[%s324 + $0x148] sm:$0xff] %v441
          %506 = vst [vmem:[%s324 + $0x150] sm:$0xff] %v442
          %507 = vst [vmem:[%s324 + $0x158] sm:$0xff] %v443
          %508 = vst [vmem:[%s324 + $0x160] sm:$0xff] %v444
          %509 = vst [vmem:[%s324 + $0x168] sm:$0xff] %v445
          %510 = vst [vmem:[%s324 + $0x170] sm:$0xff] %v446
          %511 = vst [vmem:[%s324 + $0x178] sm:$0xff] %v447
          %512 = vst [vmem:[%s324 + $0x180] sm:$0xff] %v448
          %513 = vst [vmem:[%s324 + $0x188] sm:$0xff] %v449
          %514 = vst [vmem:[%s324 + $0x190] sm:$0xff] %v450
          %515 = vst [vmem:[%s324 + $0x198] sm:$0xff] %v451
          %516 = vst [vmem:[%s324 + $0x1a0] sm:$0xff] %v452
          %517 = vst [vmem:[%s324 + $0x1a8] sm:$0xff] %v453
          %518 = vst [vmem:[%s324 + $0x1b0] sm:$0xff] %v454
          %519 = vst [vmem:[%s324 + $0x1b8] sm:$0xff] %v455
          %520 = vst [vmem:[%s324 + $0x1c0] sm:$0xff] %v456
          %521 = vst [vmem:[%s324 + $0x1c8] sm:$0xff] %v457
          %522 = vst [vmem:[%s324 + $0x1d0] sm:$0xff] %v458
          %523 = vst [vmem:[%s324 + $0x1d8] sm:$0xff] %v459
          %524 = vst [vmem:[%s324 + $0x1e0] sm:$0xff] %v460
          %525 = vst [vmem:[%s324 + $0x1e8] sm:$0xff] %v461
          %526 = vst [vmem:[%s324 + $0x1f0] sm:$0xff] %v462
          %527 = vst [vmem:[%s324 + $0x1f8] sm:$0xff] %v463
        $region48: #{tpu_custom_call.1} parent=31 // pred_fallthru
          _
        %v528 = vld [vmem:[%s324] sm:$0xff]
        %v529 = vld [vmem:[%s324 + $0x8] sm:$0xff]
        %v530 = vld [vmem:[%s324 + $0x10] sm:$0xff]
        %v531 = vld [vmem:[%s324 + $0x18] sm:$0xff]
        %v532 = vld [vmem:[%s324 + $0x20] sm:$0xff]
        %v533 = vld [vmem:[%s324 + $0x28] sm:$0xff]
        %v534 = vld [vmem:[%s324 + $0x30] sm:$0xff]
        %v535 = vld [vmem:[%s324 + $0x38] sm:$0xff]
        %v536 = vld [vmem:[%s324 + $0x40] sm:$0xff]
        %v537 = vld [vmem:[%s324 + $0x48] sm:$0xff]
        %v538 = vld [vmem:[%s324 + $0x50] sm:$0xff]
        %v539 = vld [vmem:[%s324 + $0x58] sm:$0xff]
        %v540 = vld [vmem:[%s324 + $0x60] sm:$0xff]
        %v541 = vld [vmem:[%s324 + $0x68] sm:$0xff]
        %v542 = vld [vmem:[%s324 + $0x70] sm:$0xff]
        %v543 = vld [vmem:[%s324 + $0x78] sm:$0xff]
        %v544 = vld [vmem:[%s324 + $0x80] sm:$0xff]
        %v545 = vld [vmem:[%s324 + $0x88] sm:$0xff]
        %v546 = vld [vmem:[%s324 + $0x90] sm:$0xff]
        %v547 = vld [vmem:[%s324 + $0x98] sm:$0xff]
        %v548 = vld [vmem:[%s324 + $0xa0] sm:$0xff]
        %v549 = vld [vmem:[%s324 + $0xa8] sm:$0xff]
        %v550 = vld [vmem:[%s324 + $0xb0] sm:$0xff]
        %v551 = vld [vmem:[%s324 + $0xb8] sm:$0xff]
        %v552 = vld [vmem:[%s324 + $0xc0] sm:$0xff]
        %v553 = vld [vmem:[%s324 + $0xc8] sm:$0xff]
        %v554 = vld [vmem:[%s324 + $0xd0] sm:$0xff]
        %v555 = vld [vmem:[%s324 + $0xd8] sm:$0xff]
        %v556 = vld [vmem:[%s324 + $0xe0] sm:$0xff]
        %v557 = vld [vmem:[%s324 + $0xe8] sm:$0xff]
        %v558 = vld [vmem:[%s324 + $0xf0] sm:$0xff]
        %v559 = vld [vmem:[%s324 + $0xf8] sm:$0xff]
        %v560 = vld [vmem:[%s324 + $0x100] sm:$0xff]
        %v561 = vld [vmem:[%s324 + $0x108] sm:$0xff]
        %v562 = vld [vmem:[%s324 + $0x110] sm:$0xff]
        %v563 = vld [vmem:[%s324 + $0x118] sm:$0xff]
        %v564 = vld [vmem:[%s324 + $0x120] sm:$0xff]
        %v565 = vld [vmem:[%s324 + $0x128] sm:$0xff]
        %v566 = vld [vmem:[%s324 + $0x130] sm:$0xff]
        %v567 = vld [vmem:[%s324 + $0x138] sm:$0xff]
        %v568 = vld [vmem:[%s324 + $0x140] sm:$0xff]
        %v569 = vld [vmem:[%s324 + $0x148] sm:$0xff]
        %v570 = vld [vmem:[%s324 + $0x150] sm:$0xff]
        %v571 = vld [vmem:[%s324 + $0x158] sm:$0xff]
        %v572 = vld [vmem:[%s324 + $0x160] sm:$0xff]
        %v573 = vld [vmem:[%s324 + $0x168] sm:$0xff]
        %v574 = vld [vmem:[%s324 + $0x170] sm:$0xff]
        %v575 = vld [vmem:[%s324 + $0x178] sm:$0xff]
        %v576 = vld [vmem:[%s324 + $0x180] sm:$0xff]
        %v577 = vld [vmem:[%s324 + $0x188] sm:$0xff]
        %v578 = vld [vmem:[%s324 + $0x190] sm:$0xff]
        %v579 = vld [vmem:[%s324 + $0x198] sm:$0xff]
        %v580 = vld [vmem:[%s324 + $0x1a0] sm:$0xff]
        %v581 = vld [vmem:[%s324 + $0x1a8] sm:$0xff]
        %v582 = vld [vmem:[%s324 + $0x1b0] sm:$0xff]
        %v583 = vld [vmem:[%s324 + $0x1b8] sm:$0xff]
        %v584 = vld [vmem:[%s324 + $0x1c0] sm:$0xff]
        %v585 = vld [vmem:[%s324 + $0x1c8] sm:$0xff]
        %v586 = vld [vmem:[%s324 + $0x1d0] sm:$0xff]
        %v587 = vld [vmem:[%s324 + $0x1d8] sm:$0xff]
        %v588 = vld [vmem:[%s324 + $0x1e0] sm:$0xff]
        %v589 = vld [vmem:[%s324 + $0x1e8] sm:$0xff]
        %v590 = vld [vmem:[%s324 + $0x1f0] sm:$0xff]
        %v591 = vld [vmem:[%s324 + $0x1f8] sm:$0xff]
        %v592 = vld [vmem:[%s267] sm:$0xff]
        %v593 = vld [vmem:[%s267 + $0x8] sm:$0xff]
        %v594 = vld [vmem:[%s267 + $0x10] sm:$0xff]
        %v595 = vld [vmem:[%s267 + $0x18] sm:$0xff]
        %v596 = vld [vmem:[%s267 + $0x20] sm:$0xff]
        %v597 = vld [vmem:[%s267 + $0x28] sm:$0xff]
        %v598 = vld [vmem:[%s267 + $0x30] sm:$0xff]
        %v599 = vld [vmem:[%s267 + $0x38] sm:$0xff]
        %v600 = vld [vmem:[%s267 + $0x40] sm:$0xff]
        %v601 = vld [vmem:[%s267 + $0x48] sm:$0xff]
        %v602 = vld [vmem:[%s267 + $0x50] sm:$0xff]
        %v603 = vld [vmem:[%s267 + $0x58] sm:$0xff]
        %v604 = vld [vmem:[%s267 + $0x60] sm:$0xff]
        %v605 = vld [vmem:[%s267 + $0x68] sm:$0xff]
        %v606 = vld [vmem:[%s267 + $0x70] sm:$0xff]
        %v607 = vld [vmem:[%s267 + $0x78] sm:$0xff]
        %v608 = vld [vmem:[%s267 + $0x80] sm:$0xff]
        %v609 = vld [vmem:[%s267 + $0x88] sm:$0xff]
        %v610 = vld [vmem:[%s267 + $0x90] sm:$0xff]
        %v611 = vld [vmem:[%s267 + $0x98] sm:$0xff]
        %v612 = vld [vmem:[%s267 + $0xa0] sm:$0xff]
        %v613 = vld [vmem:[%s267 + $0xa8] sm:$0xff]
        %v614 = vld [vmem:[%s267 + $0xb0] sm:$0xff]
        %v615 = vld [vmem:[%s267 + $0xb8] sm:$0xff]
        %v616 = vld [vmem:[%s267 + $0xc0] sm:$0xff]
        %v617 = vld [vmem:[%s267 + $0xc8] sm:$0xff]
        %v618 = vld [vmem:[%s267 + $0xd0] sm:$0xff]
        %v619 = vld [vmem:[%s267 + $0xd8] sm:$0xff]
        %v620 = vld [vmem:[%s267 + $0xe0] sm:$0xff]
        %v621 = vld [vmem:[%s267 + $0xe8] sm:$0xff]
        %v622 = vld [vmem:[%s267 + $0xf0] sm:$0xff]
        %v623 = vld [vmem:[%s267 + $0xf8] sm:$0xff]
        %v624 = vld [vmem:[%s267 + $0x100] sm:$0xff]
        %v625 = vld [vmem:[%s267 + $0x108] sm:$0xff]
        %v626 = vld [vmem:[%s267 + $0x110] sm:$0xff]
        %v627 = vld [vmem:[%s267 + $0x118] sm:$0xff]
        %v628 = vld [vmem:[%s267 + $0x120] sm:$0xff]
        %v629 = vld [vmem:[%s267 + $0x128] sm:$0xff]
        %v630 = vld [vmem:[%s267 + $0x130] sm:$0xff]
        %v631 = vld [vmem:[%s267 + $0x138] sm:$0xff]
        %v632 = vld [vmem:[%s267 + $0x140] sm:$0xff]
        %v633 = vld [vmem:[%s267 + $0x148] sm:$0xff]
        %v634 = vld [vmem:[%s267 + $0x150] sm:$0xff]
        %v635 = vld [vmem:[%s267 + $0x158] sm:$0xff]
        %v636 = vld [vmem:[%s267 + $0x160] sm:$0xff]
        %v637 = vld [vmem:[%s267 + $0x168] sm:$0xff]
        %v638 = vld [vmem:[%s267 + $0x170] sm:$0xff]
        %v639 = vld [vmem:[%s267 + $0x178] sm:$0xff]
        %v640 = vld [vmem:[%s267 + $0x180] sm:$0xff]
        %v641 = vld [vmem:[%s267 + $0x188] sm:$0xff]
        %v642 = vld [vmem:[%s267 + $0x190] sm:$0xff]
        %v643 = vld [vmem:[%s267 + $0x198] sm:$0xff]
        %v644 = vld [vmem:[%s267 + $0x1a0] sm:$0xff]
        %v645 = vld [vmem:[%s267 + $0x1a8] sm:$0xff]
        %v646 = vld [vmem:[%s267 + $0x1b0] sm:$0xff]
        %v647 = vld [vmem:[%s267 + $0x1b8] sm:$0xff]
        %v648 = vld [vmem:[%s267 + $0x1c0] sm:$0xff]
        %v649 = vld [vmem:[%s267 + $0x1c8] sm:$0xff]
        %v650 = vld [vmem:[%s267 + $0x1d0] sm:$0xff]
        %v651 = vld [vmem:[%s267 + $0x1d8] sm:$0xff]
        %v652 = vld [vmem:[%s267 + $0x1e0] sm:$0xff]
        %v653 = vld [vmem:[%s267 + $0x1e8] sm:$0xff]
        %v654 = vld [vmem:[%s267 + $0x1f0] sm:$0xff]
        %v655 = vld [vmem:[%s267 + $0x1f8] sm:$0xff]
        %v656 = vmul.f32 %v592, %v332
        %v657 = vmul.f32 %v593, %v333
        %v658 = vmul.f32 %v594, %v334
        %v659 = vmul.f32 %v595, %v335
        %v660 = vmul.f32 %v596, %v336
        %v661 = vmul.f32 %v597, %v337
        %v662 = vmul.f32 %v598, %v338
        %v663 = vmul.f32 %v599, %v339
        %v664 = vmul.f32 %v600, %v340
        %v665 = vmul.f32 %v601, %v341
        %v666 = vmul.f32 %v602, %v342
        %v667 = vmul.f32 %v603, %v343
        %v668 = vmul.f32 %v604, %v344
        %v669 = vmul.f32 %v605, %v345
        %v670 = vmul.f32 %v606, %v346
        %v671 = vmul.f32 %v607, %v347
        %v672 = vmul.f32 %v608, %v348
        %v673 = vmul.f32 %v609, %v349
        %v674 = vmul.f32 %v610, %v350
        %v675 = vmul.f32 %v611, %v351
        %v676 = vmul.f32 %v612, %v352
        %v677 = vmul.f32 %v613, %v353
        %v678 = vmul.f32 %v614, %v354
        %v679 = vmul.f32 %v615, %v355
        %v680 = vmul.f32 %v616, %v356
        %v681 = vmul.f32 %v617, %v357
        %v682 = vmul.f32 %v618, %v358
        %v683 = vmul.f32 %v619, %v359
        %v684 = vmul.f32 %v620, %v360
        %v685 = vmul.f32 %v621, %v361
        %v686 = vmul.f32 %v622, %v362
        %v687 = vmul.f32 %v623, %v363
        %v688 = vmul.f32 %v624, %v364
        %v689 = vmul.f32 %v625, %v365
        %v690 = vmul.f32 %v626, %v366
        %v691 = vmul.f32 %v627, %v367
        %v692 = vmul.f32 %v628, %v368
        %v693 = vmul.f32 %v629, %v369
        %v694 = vmul.f32 %v630, %v370
        %v695 = vmul.f32 %v631, %v371
        %v696 = vmul.f32 %v632, %v372
        %v697 = vmul.f32 %v633, %v373
        %v698 = vmul.f32 %v634, %v374
        %v699 = vmul.f32 %v635, %v375
        %v700 = vmul.f32 %v636, %v376
        %v701 = vmul.f32 %v637, %v377
        %v702 = vmul.f32 %v638, %v378
        %v703 = vmul.f32 %v639, %v379
        %v704 = vmul.f32 %v640, %v380
        %v705 = vmul.f32 %v641, %v381
        %v706 = vmul.f32 %v642, %v382
        %v707 = vmul.f32 %v643, %v383
        %v708 = vmul.f32 %v644, %v384
        %v709 = vmul.f32 %v645, %v385
        %v710 = vmul.f32 %v646, %v386
        %v711 = vmul.f32 %v647, %v387
        %v712 = vmul.f32 %v648, %v388
        %v713 = vmul.f32 %v649, %v389
        %v714 = vmul.f32 %v650, %v390
        %v715 = vmul.f32 %v651, %v391
        %v716 = vmul.f32 %v652, %v392
        %v717 = vmul.f32 %v653, %v393
        %v718 = vmul.f32 %v654, %v394
        %v719 = vmul.f32 %v655, %v395
        %v720 = vadd.f32 %v528, %v656
        %v721 = vadd.f32 %v529, %v657
        %v722 = vadd.f32 %v530, %v658
        %v723 = vadd.f32 %v531, %v659
        %v724 = vadd.f32 %v532, %v660
        %v725 = vadd.f32 %v533, %v661
        %v726 = vadd.f32 %v534, %v662
        %v727 = vadd.f32 %v535, %v663
        %v728 = vadd.f32 %v536, %v664
        %v729 = vadd.f32 %v537, %v665
        %v730 = vadd.f32 %v538, %v666
        %v731 = vadd.f32 %v539, %v667
        %v732 = vadd.f32 %v540, %v668
        %v733 = vadd.f32 %v541, %v669
        %v734 = vadd.f32 %v542, %v670
        %v735 = vadd.f32 %v543, %v671
        %v736 = vadd.f32 %v544, %v672
        %v737 = vadd.f32 %v545, %v673
        %v738 = vadd.f32 %v546, %v674
        %v739 = vadd.f32 %v547, %v675
        %v740 = vadd.f32 %v548, %v676
        %v741 = vadd.f32 %v549, %v677
        %v742 = vadd.f32 %v550, %v678
        %v743 = vadd.f32 %v551, %v679
        %v744 = vadd.f32 %v552, %v680
        %v745 = vadd.f32 %v553, %v681
        %v746 = vadd.f32 %v554, %v682
        %v747 = vadd.f32 %v555, %v683
        %v748 = vadd.f32 %v556, %v684
        %v749 = vadd.f32 %v557, %v685
        %v750 = vadd.f32 %v558, %v686
        %v751 = vadd.f32 %v559, %v687
        %v752 = vadd.f32 %v560, %v688
        %v753 = vadd.f32 %v561, %v689
        %v754 = vadd.f32 %v562, %v690
        %v755 = vadd.f32 %v563, %v691
        %v756 = vadd.f32 %v564, %v692
        %v757 = vadd.f32 %v565, %v693
        %v758 = vadd.f32 %v566, %v694
        %v759 = vadd.f32 %v567, %v695
        %v760 = vadd.f32 %v568, %v696
        %v761 = vadd.f32 %v569, %v697
        %v762 = vadd.f32 %v570, %v698
        %v763 = vadd.f32 %v571, %v699
        %v764 = vadd.f32 %v572, %v700
        %v765 = vadd.f32 %v573, %v701
        %v766 = vadd.f32 %v574, %v702
        %v767 = vadd.f32 %v575, %v703
        %v768 = vadd.f32 %v576, %v704
        %v769 = vadd.f32 %v577, %v705
        %v770 = vadd.f32 %v578, %v706
        %v771 = vadd.f32 %v579, %v707
        %v772 = vadd.f32 %v580, %v708
        %v773 = vadd.f32 %v581, %v709
        %v774 = vadd.f32 %v582, %v710
        %v775 = vadd.f32 %v583, %v711
        %v776 = vadd.f32 %v584, %v712
        %v777 = vadd.f32 %v585, %v713
        %v778 = vadd.f32 %v586, %v714
        %v779 = vadd.f32 %v587, %v715
        %v780 = vadd.f32 %v588, %v716
        %v781 = vadd.f32 %v589, %v717
        %v782 = vadd.f32 %v590, %v718
        %v783 = vadd.f32 %v591, %v719
        %vm784 = vcmp.ge.f32.partialorder %v720, 1.0
        %vm785 = vcmp.ge.f32.partialorder %v721, 1.0
        %vm786 = vcmp.ge.f32.partialorder %v722, 1.0
        %vm787 = vcmp.ge.f32.partialorder %v723, 1.0
        %vm788 = vcmp.ge.f32.partialorder %v724, 1.0
        %vm789 = vcmp.ge.f32.partialorder %v725, 1.0
        %vm790 = vcmp.ge.f32.partialorder %v726, 1.0
        %vm791 = vcmp.ge.f32.partialorder %v727, 1.0
        %vm792 = vcmp.ge.f32.partialorder %v728, 1.0
        %vm793 = vcmp.ge.f32.partialorder %v729, 1.0
        %vm794 = vcmp.ge.f32.partialorder %v730, 1.0
        %vm795 = vcmp.ge.f32.partialorder %v731, 1.0
        %vm796 = vcmp.ge.f32.partialorder %v732, 1.0
        %vm797 = vcmp.ge.f32.partialorder %v733, 1.0
        %vm798 = vcmp.ge.f32.partialorder %v734, 1.0
        %vm799 = vcmp.ge.f32.partialorder %v735, 1.0
        %vm800 = vcmp.ge.f32.partialorder %v736, 1.0
        %vm801 = vcmp.ge.f32.partialorder %v737, 1.0
        %vm802 = vcmp.ge.f32.partialorder %v738, 1.0
        %vm803 = vcmp.ge.f32.partialorder %v739, 1.0
        %vm804 = vcmp.ge.f32.partialorder %v740, 1.0
        %vm805 = vcmp.ge.f32.partialorder %v741, 1.0
        %vm806 = vcmp.ge.f32.partialorder %v742, 1.0
        %vm807 = vcmp.ge.f32.partialorder %v743, 1.0
        %vm808 = vcmp.ge.f32.partialorder %v744, 1.0
        %vm809 = vcmp.ge.f32.partialorder %v745, 1.0
        %vm810 = vcmp.ge.f32.partialorder %v746, 1.0
        %vm811 = vcmp.ge.f32.partialorder %v747, 1.0
        %vm812 = vcmp.ge.f32.partialorder %v748, 1.0
        %vm813 = vcmp.ge.f32.partialorder %v749, 1.0
        %vm814 = vcmp.ge.f32.partialorder %v750, 1.0
        %vm815 = vcmp.ge.f32.partialorder %v751, 1.0
        %vm816 = vcmp.ge.f32.partialorder %v752, 1.0
        %vm817 = vcmp.ge.f32.partialorder %v753, 1.0
        %vm818 = vcmp.ge.f32.partialorder %v754, 1.0
        %vm819 = vcmp.ge.f32.partialorder %v755, 1.0
        %vm820 = vcmp.ge.f32.partialorder %v756, 1.0
        %vm821 = vcmp.ge.f32.partialorder %v757, 1.0
        %vm822 = vcmp.ge.f32.partialorder %v758, 1.0
        %vm823 = vcmp.ge.f32.partialorder %v759, 1.0
        %vm824 = vcmp.ge.f32.partialorder %v760, 1.0
        %vm825 = vcmp.ge.f32.partialorder %v761, 1.0
        %vm826 = vcmp.ge.f32.partialorder %v762, 1.0
        %vm827 = vcmp.ge.f32.partialorder %v763, 1.0
        %vm828 = vcmp.ge.f32.partialorder %v764, 1.0
        %vm829 = vcmp.ge.f32.partialorder %v765, 1.0
        %vm830 = vcmp.ge.f32.partialorder %v766, 1.0
        %vm831 = vcmp.ge.f32.partialorder %v767, 1.0
        %vm832 = vcmp.ge.f32.partialorder %v768, 1.0
        %vm833 = vcmp.ge.f32.partialorder %v769, 1.0
        %vm834 = vcmp.ge.f32.partialorder %v770, 1.0
        %vm835 = vcmp.ge.f32.partialorder %v771, 1.0
        %vm836 = vcmp.ge.f32.partialorder %v772, 1.0
        %vm837 = vcmp.ge.f32.partialorder %v773, 1.0
        %vm838 = vcmp.ge.f32.partialorder %v774, 1.0
        %vm839 = vcmp.ge.f32.partialorder %v775, 1.0
        %vm840 = vcmp.ge.f32.partialorder %v776, 1.0
        %vm841 = vcmp.ge.f32.partialorder %v777, 1.0
        %vm842 = vcmp.ge.f32.partialorder %v778, 1.0
        %vm843 = vcmp.ge.f32.partialorder %v779, 1.0
        %vm844 = vcmp.ge.f32.partialorder %v780, 1.0
        %vm845 = vcmp.ge.f32.partialorder %v781, 1.0
        %vm846 = vcmp.ge.f32.partialorder %v782, 1.0
        %vm847 = vcmp.ge.f32.partialorder %v783, 1.0
        %vm848 = vmpackc.low %vm788, %vm784
        %vm849 = vmpackc.low %vm796, %vm792
        %vm850 = vmpackc.even %vm849, %vm848
        %vm851 = vmpackc.low %vm789, %vm785
        %vm852 = vmpackc.low %vm797, %vm793
        %vm853 = vmpackc.even %vm852, %vm851
        %vm854 = vmpackc.low %vm790, %vm786
        %vm855 = vmpackc.low %vm798, %vm794
        %vm856 = vmpackc.even %vm855, %vm854
        %vm857 = vmpackc.low %vm791, %vm787
        %vm858 = vmpackc.low %vm799, %vm795
        %vm859 = vmpackc.even %vm858, %vm857
        %vm860 = vmpackc.low %vm804, %vm800
        %vm861 = vmpackc.low %vm812, %vm808
        %vm862 = vmpackc.even %vm861, %vm860
        %vm863 = vmpackc.low %vm805, %vm801
        %vm864 = vmpackc.low %vm813, %vm809
        %vm865 = vmpackc.even %vm864, %vm863
        %vm866 = vmpackc.low %vm806, %vm802
        %vm867 = vmpackc.low %vm814, %vm810
        %vm868 = vmpackc.even %vm867, %vm866
        %vm869 = vmpackc.low %vm807, %vm803
        %vm870 = vmpackc.low %vm815, %vm811
        %vm871 = vmpackc.even %vm870, %vm869
        %vm872 = vmpackc.low %vm820, %vm816
        %vm873 = vmpackc.low %vm828, %vm824
        %vm874 = vmpackc.even %vm873, %vm872
        %vm875 = vmpackc.low %vm821, %vm817
        %vm876 = vmpackc.low %vm829, %vm825
        %vm877 = vmpackc.even %vm876, %vm875
        %vm878 = vmpackc.low %vm822, %vm818
        %vm879 = vmpackc.low %vm830, %vm826
        %vm880 = vmpackc.even %vm879, %vm878
        %vm881 = vmpackc.low %vm823, %vm819
        %vm882 = vmpackc.low %vm831, %vm827
        %vm883 = vmpackc.even %vm882, %vm881
        %vm884 = vmpackc.low %vm836, %vm832
        %vm885 = vmpackc.low %vm844, %vm840
        %vm886 = vmpackc.even %vm885, %vm884
        %vm887 = vmpackc.low %vm837, %vm833
        %vm888 = vmpackc.low %vm845, %vm841
        %vm889 = vmpackc.even %vm888, %vm887
        %vm890 = vmpackc.low %vm838, %vm834
        %vm891 = vmpackc.low %vm846, %vm842
        %vm892 = vmpackc.even %vm891, %vm890
        %vm893 = vmpackc.low %vm839, %vm835
        %vm894 = vmpackc.low %vm847, %vm843
        %vm895 = vmpackc.even %vm894, %vm893
        %v896 = vsel %vm850, 16843009, 0
        %v897 = vsel %vm853, 16843009, 0
        %v898 = vsel %vm856, 16843009, 0
        %v899 = vsel %vm859, 16843009, 0
        %v900 = vsel %vm862, 16843009, 0
        %v901 = vsel %vm865, 16843009, 0
        %v902 = vsel %vm868, 16843009, 0
        %v903 = vsel %vm871, 16843009, 0
        %v904 = vsel %vm874, 16843009, 0
        %v905 = vsel %vm877, 16843009, 0
        %v906 = vsel %vm880, 16843009, 0
        %v907 = vsel %vm883, 16843009, 0
        %v908 = vsel %vm886, 16843009, 0
        %v909 = vsel %vm889, 16843009, 0
        %v910 = vsel %vm892, 16843009, 0
        %v911 = vsel %vm895, 16843009, 0
        %912 = vst [vmem:[%s317] sm:$0xff] %v896
        %913 = vst [vmem:[%s317 + $0x8] sm:$0xff] %v897
        %914 = vst [vmem:[%s317 + $0x10] sm:$0xff] %v898
        %915 = vst [vmem:[%s317 + $0x18] sm:$0xff] %v899
        %916 = vst [vmem:[%s317 + $0x20] sm:$0xff] %v900
        %917 = vst [vmem:[%s317 + $0x28] sm:$0xff] %v901
        %918 = vst [vmem:[%s317 + $0x30] sm:$0xff] %v902
        %919 = vst [vmem:[%s317 + $0x38] sm:$0xff] %v903
        %920 = vst [vmem:[%s317 + $0x40] sm:$0xff] %v904
        %921 = vst [vmem:[%s317 + $0x48] sm:$0xff] %v905
        %922 = vst [vmem:[%s317 + $0x50] sm:$0xff] %v906
        %923 = vst [vmem:[%s317 + $0x58] sm:$0xff] %v907
        %924 = vst [vmem:[%s317 + $0x60] sm:$0xff] %v908
        %925 = vst [vmem:[%s317 + $0x68] sm:$0xff] %v909
        %926 = vst [vmem:[%s317 + $0x70] sm:$0xff] %v910
        %927 = vst [vmem:[%s317 + $0x78] sm:$0xff] %v911
        %v928 = vmax.f32 %v720, 0.0
        %v929 = vmax.f32 %v721, 0.0
        %v930 = vmax.f32 %v722, 0.0
        %v931 = vmax.f32 %v723, 0.0
        %v932 = vmax.f32 %v724, 0.0
        %v933 = vmax.f32 %v725, 0.0
        %v934 = vmax.f32 %v726, 0.0
        %v935 = vmax.f32 %v727, 0.0
        %v936 = vmax.f32 %v728, 0.0
        %v937 = vmax.f32 %v729, 0.0
        %v938 = vmax.f32 %v730, 0.0
        %v939 = vmax.f32 %v731, 0.0
        %v940 = vmax.f32 %v732, 0.0
        %v941 = vmax.f32 %v733, 0.0
        %v942 = vmax.f32 %v734, 0.0
        %v943 = vmax.f32 %v735, 0.0
        %v944 = vmax.f32 %v736, 0.0
        %v945 = vmax.f32 %v737, 0.0
        %v946 = vmax.f32 %v738, 0.0
        %v947 = vmax.f32 %v739, 0.0
        %v948 = vmax.f32 %v740, 0.0
        %v949 = vmax.f32 %v741, 0.0
        %v950 = vmax.f32 %v742, 0.0
        %v951 = vmax.f32 %v743, 0.0
        %v952 = vmax.f32 %v744, 0.0
        %v953 = vmax.f32 %v745, 0.0
        %v954 = vmax.f32 %v746, 0.0
        %v955 = vmax.f32 %v747, 0.0
        %v956 = vmax.f32 %v748, 0.0
        %v957 = vmax.f32 %v749, 0.0
        %v958 = vmax.f32 %v750, 0.0
        %v959 = vmax.f32 %v751, 0.0
        %v960 = vmax.f32 %v752, 0.0
        %v961 = vmax.f32 %v753, 0.0
        %v962 = vmax.f32 %v754, 0.0
        %v963 = vmax.f32 %v755, 0.0
        %v964 = vmax.f32 %v756, 0.0
        %v965 = vmax.f32 %v757, 0.0
        %v966 = vmax.f32 %v758, 0.0
        %v967 = vmax.f32 %v759, 0.0
        %v968 = vmax.f32 %v760, 0.0
        %v969 = vmax.f32 %v761, 0.0
        %v970 = vmax.f32 %v762, 0.0
        %v971 = vmax.f32 %v763, 0.0
        %v972 = vmax.f32 %v764, 0.0
        %v973 = vmax.f32 %v765, 0.0
        %v974 = vmax.f32 %v766, 0.0
        %v975 = vmax.f32 %v767, 0.0
        %v976 = vmax.f32 %v768, 0.0
        %v977 = vmax.f32 %v769, 0.0
        %v978 = vmax.f32 %v770, 0.0
        %v979 = vmax.f32 %v771, 0.0
        %v980 = vmax.f32 %v772, 0.0
        %v981 = vmax.f32 %v773, 0.0
        %v982 = vmax.f32 %v774, 0.0
        %v983 = vmax.f32 %v775, 0.0
        %v984 = vmax.f32 %v776, 0.0
        %v985 = vmax.f32 %v777, 0.0
        %v986 = vmax.f32 %v778, 0.0
        %v987 = vmax.f32 %v779, 0.0
        %v988 = vmax.f32 %v780, 0.0
        %v989 = vmax.f32 %v781, 0.0
        %v990 = vmax.f32 %v782, 0.0
        %v991 = vmax.f32 %v783, 0.0
        %v992 = vmin.f32 %v928, 1.0
        %v993 = vmin.f32 %v929, 1.0
        %v994 = vmin.f32 %v930, 1.0
        %v995 = vmin.f32 %v931, 1.0
        %v996 = vmin.f32 %v932, 1.0
        %v997 = vmin.f32 %v933, 1.0
        %v998 = vmin.f32 %v934, 1.0
        %v999 = vmin.f32 %v935, 1.0
        %v1000 = vmin.f32 %v936, 1.0
        %v1001 = vmin.f32 %v937, 1.0
        %v1002 = vmin.f32 %v938, 1.0
        %v1003 = vmin.f32 %v939, 1.0
        %v1004 = vmin.f32 %v940, 1.0
        %v1005 = vmin.f32 %v941, 1.0
        %v1006 = vmin.f32 %v942, 1.0
        %v1007 = vmin.f32 %v943, 1.0
        %v1008 = vmin.f32 %v944, 1.0
        %v1009 = vmin.f32 %v945, 1.0
        %v1010 = vmin.f32 %v946, 1.0
        %v1011 = vmin.f32 %v947, 1.0
        %v1012 = vmin.f32 %v948, 1.0
        %v1013 = vmin.f32 %v949, 1.0
        %v1014 = vmin.f32 %v950, 1.0
        %v1015 = vmin.f32 %v951, 1.0
        %v1016 = vmin.f32 %v952, 1.0
        %v1017 = vmin.f32 %v953, 1.0
        %v1018 = vmin.f32 %v954, 1.0
        %v1019 = vmin.f32 %v955, 1.0
        %v1020 = vmin.f32 %v956, 1.0
        %v1021 = vmin.f32 %v957, 1.0
        %v1022 = vmin.f32 %v958, 1.0
        %v1023 = vmin.f32 %v959, 1.0
        %v1024 = vmin.f32 %v960, 1.0
        %v1025 = vmin.f32 %v961, 1.0
        %v1026 = vmin.f32 %v962, 1.0
        %v1027 = vmin.f32 %v963, 1.0
        %v1028 = vmin.f32 %v964, 1.0
        %v1029 = vmin.f32 %v965, 1.0
        %v1030 = vmin.f32 %v966, 1.0
        %v1031 = vmin.f32 %v967, 1.0
        %v1032 = vmin.f32 %v968, 1.0
        %v1033 = vmin.f32 %v969, 1.0
        %v1034 = vmin.f32 %v970, 1.0
        %v1035 = vmin.f32 %v971, 1.0
        %v1036 = vmin.f32 %v972, 1.0
        %v1037 = vmin.f32 %v973, 1.0
        %v1038 = vmin.f32 %v974, 1.0
        %v1039 = vmin.f32 %v975, 1.0
        %v1040 = vmin.f32 %v976, 1.0
        %v1041 = vmin.f32 %v977, 1.0
        %v1042 = vmin.f32 %v978, 1.0
        %v1043 = vmin.f32 %v979, 1.0
        %v1044 = vmin.f32 %v980, 1.0
        %v1045 = vmin.f32 %v981, 1.0
        %v1046 = vmin.f32 %v982, 1.0
        %v1047 = vmin.f32 %v983, 1.0
        %v1048 = vmin.f32 %v984, 1.0
        %v1049 = vmin.f32 %v985, 1.0
        %v1050 = vmin.f32 %v986, 1.0
        %v1051 = vmin.f32 %v987, 1.0
        %v1052 = vmin.f32 %v988, 1.0
        %v1053 = vmin.f32 %v989, 1.0
        %v1054 = vmin.f32 %v990, 1.0
        %v1055 = vmin.f32 %v991, 1.0
        %1056 = vst [vmem:[%s324] sm:$0xff] %v992
        %1057 = vst [vmem:[%s324 + $0x8] sm:$0xff] %v993
        %1058 = vst [vmem:[%s324 + $0x10] sm:$0xff] %v994
        %1059 = vst [vmem:[%s324 + $0x18] sm:$0xff] %v995
        %1060 = vst [vmem:[%s324 + $0x20] sm:$0xff] %v996
        %1061 = vst [vmem:[%s324 + $0x28] sm:$0xff] %v997
        %1062 = vst [vmem:[%s324 + $0x30] sm:$0xff] %v998
        %1063 = vst [vmem:[%s324 + $0x38] sm:$0xff] %v999
        %1064 = vst [vmem:[%s324 + $0x40] sm:$0xff] %v1000
        %1065 = vst [vmem:[%s324 + $0x48] sm:$0xff] %v1001
        %1066 = vst [vmem:[%s324 + $0x50] sm:$0xff] %v1002
        %1067 = vst [vmem:[%s324 + $0x58] sm:$0xff] %v1003
        %1068 = vst [vmem:[%s324 + $0x60] sm:$0xff] %v1004
        %1069 = vst [vmem:[%s324 + $0x68] sm:$0xff] %v1005
        %1070 = vst [vmem:[%s324 + $0x70] sm:$0xff] %v1006
        %1071 = vst [vmem:[%s324 + $0x78] sm:$0xff] %v1007
        %1072 = vst [vmem:[%s324 + $0x80] sm:$0xff] %v1008
        %1073 = vst [vmem:[%s324 + $0x88] sm:$0xff] %v1009
        %1074 = vst [vmem:[%s324 + $0x90] sm:$0xff] %v1010
        %1075 = vst [vmem:[%s324 + $0x98] sm:$0xff] %v1011
        %1076 = vst [vmem:[%s324 + $0xa0] sm:$0xff] %v1012
        %1077 = vst [vmem:[%s324 + $0xa8] sm:$0xff] %v1013
        %1078 = vst [vmem:[%s324 + $0xb0] sm:$0xff] %v1014
        %1079 = vst [vmem:[%s324 + $0xb8] sm:$0xff] %v1015
        %1080 = vst [vmem:[%s324 + $0xc0] sm:$0xff] %v1016
        %1081 = vst [vmem:[%s324 + $0xc8] sm:$0xff] %v1017
        %1082 = vst [vmem:[%s324 + $0xd0] sm:$0xff] %v1018
        %1083 = vst [vmem:[%s324 + $0xd8] sm:$0xff] %v1019
        %1084 = vst [vmem:[%s324 + $0xe0] sm:$0xff] %v1020
        %1085 = vst [vmem:[%s324 + $0xe8] sm:$0xff] %v1021
        %1086 = vst [vmem:[%s324 + $0xf0] sm:$0xff] %v1022
        %1087 = vst [vmem:[%s324 + $0xf8] sm:$0xff] %v1023
        %1088 = vst [vmem:[%s324 + $0x100] sm:$0xff] %v1024
        %1089 = vst [vmem:[%s324 + $0x108] sm:$0xff] %v1025
        %1090 = vst [vmem:[%s324 + $0x110] sm:$0xff] %v1026
        %1091 = vst [vmem:[%s324 + $0x118] sm:$0xff] %v1027
        %1092 = vst [vmem:[%s324 + $0x120] sm:$0xff] %v1028
        %1093 = vst [vmem:[%s324 + $0x128] sm:$0xff] %v1029
        %1094 = vst [vmem:[%s324 + $0x130] sm:$0xff] %v1030
        %1095 = vst [vmem:[%s324 + $0x138] sm:$0xff] %v1031
        %1096 = vst [vmem:[%s324 + $0x140] sm:$0xff] %v1032
        %1097 = vst [vmem:[%s324 + $0x148] sm:$0xff] %v1033
        %1098 = vst [vmem:[%s324 + $0x150] sm:$0xff] %v1034
        %1099 = vst [vmem:[%s324 + $0x158] sm:$0xff] %v1035
        %1100 = vst [vmem:[%s324 + $0x160] sm:$0xff] %v1036
        %1101 = vst [vmem:[%s324 + $0x168] sm:$0xff] %v1037
        %1102 = vst [vmem:[%s324 + $0x170] sm:$0xff] %v1038
        %1103 = vst [vmem:[%s324 + $0x178] sm:$0xff] %v1039
        %1104 = vst [vmem:[%s324 + $0x180] sm:$0xff] %v1040
        %1105 = vst [vmem:[%s324 + $0x188] sm:$0xff] %v1041
        %1106 = vst [vmem:[%s324 + $0x190] sm:$0xff] %v1042
        %1107 = vst [vmem:[%s324 + $0x198] sm:$0xff] %v1043
        %1108 = vst [vmem:[%s324 + $0x1a0] sm:$0xff] %v1044
        %1109 = vst [vmem:[%s324 + $0x1a8] sm:$0xff] %v1045
        %1110 = vst [vmem:[%s324 + $0x1b0] sm:$0xff] %v1046
        %1111 = vst [vmem:[%s324 + $0x1b8] sm:$0xff] %v1047
        %1112 = vst [vmem:[%s324 + $0x1c0] sm:$0xff] %v1048
        %1113 = vst [vmem:[%s324 + $0x1c8] sm:$0xff] %v1049
        %1114 = vst [vmem:[%s324 + $0x1d0] sm:$0xff] %v1050
        %1115 = vst [vmem:[%s324 + $0x1d8] sm:$0xff] %v1051
        %1116 = vst [vmem:[%s324 + $0x1e0] sm:$0xff] %v1052
        %1117 = vst [vmem:[%s324 + $0x1e8] sm:$0xff] %v1053
        %1118 = vst [vmem:[%s324 + $0x1f0] sm:$0xff] %v1054
        %1119 = vst [vmem:[%s324 + $0x1f8] sm:$0xff] %v1055
        %s1120 = sand.u32 %s130, 1
        %s1121 = scalar_lea.sflag [#allocation4], %s1120
        %s1122 = sand.u32 %s130, 1
        %s1123 = smul.addr %s1122, 128
        %s1124 = scalar_lea.vmem [#allocation8], %s1123
        %s1125 = sand.u32 %s156, 1
        %s1126 = scalar_lea.sflag [#allocation10], %s1125
        %s1127 = sand.u32 %s156, 1
        %s1128 = smul.addr %s1127, 512
        %s1129 = scalar_lea.vmem [#allocation9], %s1128
        // Predicated region
        $region49: #{tpu_custom_call.1} parent=31 // pred_check
          %p1130 = pneg %p140
        $region50: #{tpu_custom_call.1} parent=31 // pred_check_branch
          %1132 = sbr.rel (%p1130) target = $region52
        $region51: #{tpu_custom_call.1} parent=31 // pred_region
          %s1133 = smul.u32 4, %s32
          %s1135 = ssub.s32 2048, 2048
          %1136 = vsyncadd %s1121, %s1135
          %s1137 = smul.addr %s1133, 4
          %s1138 = smul.addr %s33, 32
          %s1139 = sadd.s32 %s1137, %s1138
          %s1140 = smul.addr %s1139, 128
          %s1141 = scalar_lea.hbm %s3, %s1140
          %s1142 = sshll.u32 %s1124, 4
          %s1143 = int_to_ptr.vmem [resolvable:$true] %s1142
          %1148 = dma.vmem_to_hbm [thread:$0]  %s1143, 2048, %s1141, %s1121, 512, 512, 32
        $region52: #{tpu_custom_call.1} parent=31 // pred_fallthru
          _
        // Predicated region
        $region53: #{tpu_custom_call.1} parent=31 // pred_check
          %p1149 = pneg %p166
        $region54: #{tpu_custom_call.1} parent=31 // pred_check_branch
          %1151 = sbr.rel (%p1149) target = $region56
        $region55: #{tpu_custom_call.1} parent=31 // pred_region
          %s1152 = smul.u32 16, %s32
          %s1154 = ssub.s32 8192, 8192
          %1155 = vsyncadd %s1126, %s1154
          %s1156 = smul.addr %s1152, 4
          %s1157 = smul.addr %s1156, 128
          %s1158 = scalar_lea.hbm %s4, %s1157
          %s1159 = sshll.u32 %s1129, 4
          %s1160 = int_to_ptr.vmem [resolvable:$true] %s1159
          %1165 = dma.vmem_to_hbm [thread:$0]  %s1160, 8192, %s1158, %s1126, 512, 512, 32
        $region56: #{tpu_custom_call.1} parent=31 // pred_fallthru
          _
      $region32: #{tpu_custom_call.1} parent=5 // pred_fallthru
        _
      %p1166 = scmp.le.s32.totalorder 2, %s23
      // Predicated region
      $region57: #{tpu_custom_call.1} parent=5 // pred_check
        %p1167 = pneg %p1166
      $region58: #{tpu_custom_call.1} parent=5 // pred_check_branch
        %1169 = sbr.rel (%p1167) target = $region60
      $region59: #{tpu_custom_call.1} parent=5 // pred_region
        %s1170 = ssub.s32 %s23, 2
        // Predicated region
        $region61: #{tpu_custom_call.1} parent=59 // pred_check
          %p1171 = pneg %p146
        $region62: #{tpu_custom_call.1} parent=59 // pred_check_branch
          %1173 = sbr.rel (%p1171) target = $region64
        $region63: #{tpu_custom_call.1} parent=59 // pred_region
          %s1174 = sand.u32 %s131, 1
          %s1175 = scalar_lea.sflag [#allocation4], %s1174
          %s1176 = sand.u32 %s131, 1
          %s1177 = smul.addr %s1176, 128
          %s1178 = scalar_lea.vmem [#allocation8], %s1177
          %1179 = dma.done %s1175, 2048
        $region64: #{tpu_custom_call.1} parent=59 // pred_fallthru
          _
        // Predicated region
        $region65: #{tpu_custom_call.1} parent=59 // pred_check
          %p1180 = pneg %p172
        $region66: #{tpu_custom_call.1} parent=59 // pred_check_branch
          %1182 = sbr.rel (%p1180) target = $region68
        $region67: #{tpu_custom_call.1} parent=59 // pred_region
          %s1183 = sand.u32 %s157, 1
          %s1184 = scalar_lea.sflag [#allocation10], %s1183
          %s1185 = sand.u32 %s157, 1
          %s1186 = smul.addr %s1185, 512
          %s1187 = scalar_lea.vmem [#allocation9], %s1186
          %1188 = dma.done %s1184, 8192
        $region68: #{tpu_custom_call.1} parent=59 // pred_fallthru
          _
      $region60: #{tpu_custom_call.1} parent=5 // pred_fallthru
        _
    $region6: #{tpu_custom_call.1} parent=1 // loop_footer
      %s27 = sadd.s32 1, %s23
    $region7: #{tpu_custom_call.1} parent=1 // loop_footer_branch
      %22 = sbr.rel target = $region3
    $region8: #{tpu_custom_call.1} parent=1 // loop_exit
      _
    %1189 = vsyncpa [#allocation3], 1
    %s1190 = scalar_lea.sflag [#allocation3], 1
    %1191 = vsyncpa %s1190, 1
    %1192 = vsyncpa [#allocation6], 1
    %s1193 = scalar_lea.sflag [#allocation6], 1
    %1194 = vsyncpa %s1193, 1
    %1195 = vsyncpa [#allocation4], 1
    %s1196 = scalar_lea.sflag [#allocation4], 1
    %1197 = vsyncpa %s1196, 1
    %1198 = vsyncpa [#allocation10], 1
    %s1199 = scalar_lea.sflag [#allocation10], 1
    %1200 = vsyncpa %s1199, 1

</llo_original>
